<compile_context>
chip_gen: v7x
topology: tpu7x:2x2x1
jax: 0.10.0
libtpu: 0.0.40
codegen_flags: <defaults>
</compile_context>

<pallas_src>
import jax
import jax.numpy as jnp
from jax import lax
from jax.experimental import pallas as pl
from jax.experimental.pallas import tpu as pltpu


def _kernel(x_ref, ils_ref, w1t_ref, b1_ref, w2t_ref, b2_ref, w3t_ref, b3_ref,
            o_ref):
    """One row tile: natural x (TR, dx) -> natural out (TR, dout).

    A ragged last tile (tile_rows not dividing rows) is safe because every op
    here is row-independent: the matmuls contract feature axes only, the rest
    is elementwise / per-row, so garbage rows in the padded part of the block
    cannot leak into valid rows and Pallas masks their writeback.  Any future
    cross-row op (e.g. a reduction over rows) would need an explicit mask.
    """
    x = x_ref[...]                                         # (TR, dx) f32
    dx = x_ref.shape[1]
    dim_x = ils_ref.shape[1]

    # ---- spatial generalisation term (exact f32: VPU mul + tiny lane reduce)
    diff_x = x[:, dx - dim_x:]                             # (TR, dim_x) static slice
    dist = jnp.sum(diff_x * ils_ref[...], axis=1, keepdims=True)   # (TR, 1)
    dots_x = -0.5 * dist * dist                            # (TR, 1)

    # ---- MLP, lane-dense internally (rows on the 128-lane axis) ------------
    # Layer 1 as an NT matmul: (width, dx) . (TR, dx)^T -> (width, TR); the
    # MXU consumes the transposed rhs directly, so no explicit relayout of the
    # activation tile is needed on the input side.
    h = lax.dot_general(w1t_ref[...], x, (((1,), (1,)), ((), ())),
                        preferred_element_type=jnp.float32)
    h = jnp.maximum(h + b1_ref[...], 0.0)                  # (width, TR)
    h = jnp.dot(w2t_ref[...], h, preferred_element_type=jnp.float32)
    h = jnp.maximum(h + b2_ref[...], 0.0)                  # (width, TR)
    dots = jnp.dot(w3t_ref[...], h, preferred_element_type=jnp.float32)
    dots = dots + b3_ref[...]                              # (dout, TR) lane-dense

    # One in-kernel transpose to the natural output orientation (XLU slot,
    # otherwise idle), then the per-row spatial term broadcast over dout.
    o_ref[...] = dots.T + dots_x                           # (TR, dout)


def _lane_pad(d):
    return 128 * max(1, (d + 127) // 128)


def spatial_generalisation_mlp_kernel(diff, params, lengthscale, dim_x,
                                      tile_rows=None):
    """diff: [m, n1, n2, dx] f32 -> [m, n1, n2, dout] f32."""
    m, n1, n2, dx = diff.shape
    w1, b1, w2, b2, w3, b3 = params
    width = w1.shape[1]
    dout = w3.shape[1]
    rows = m * n1 * n2

    # Natural layouts only; these reshapes are contiguous (no HBM copy).
    x = diff.reshape(rows, dx).astype(jnp.float32)

    # Tiny, one-time parameter relayouts for the lane-dense compute core.
    w1t = w1.T.astype(jnp.float32)                         # (width, dx)
    b1c = b1.reshape(width, 1).astype(jnp.float32)
    w2t = w2.T.astype(jnp.float32)                         # (width, width)
    b2c = b2.reshape(width, 1).astype(jnp.float32)
    w3t = w3.T.astype(jnp.float32)                         # (dout, width)
    b3c = b3.reshape(dout, 1).astype(jnp.float32)

    # 1/lengthscale row over the dim_x spatial features (scalar or (dim_x,)).
    ls = jnp.broadcast_to(jnp.asarray(lengthscale, jnp.float32).reshape(-1),
                          (dim_x,))
    ils = (1.0 / ls).reshape(1, dim_x)

    # ---- tile selection -----------------------------------------------------
    # Natural-layout blocks pad their minor dim to 128 lanes in VMEM, so the
    # per-row footprint is: double-buffered x block + double-buffered out block
    # + transposed result temp + the two (width, TR) hidden activations.
    bytes_per_row = 4 * (2 * _lane_pad(dx) + 3 * _lane_pad(dout) + 2 * width)
    if tile_rows is None:
        budget = 20 << 20          # fits v5e/v6e and v7x's smaller scoped VMEM
        tile_rows = (budget // bytes_per_row) // 128 * 128
        tile_rows = max(512, min(32768, tile_rows))
    else:
        tile_rows = max(128, (tile_rows // 128) * 128)
    if rows >= 256:
        # Keep at least two grid steps so both v7x TensorCores get work.
        tile_rows = min(tile_rows, max(128, (rows // 2) // 128 * 128))
    if rows < tile_rows:
        tile_rows = rows           # single full block (block == full dim is legal)
    grid = (pl.cdiv(rows, tile_rows),)

    footprint = bytes_per_row * tile_rows + (1 << 20)      # + params & slack
    vmem_limit = int(max(32 << 20, min(footprint + (8 << 20), 64 << 20)))

    flops = (2 * rows * (dx * width + width * width + width * dout)
             + rows * (2 * dim_x + 2 * width + dout + 3))
    bytes_accessed = 4 * (rows * (dx + dout)
                          + width * (dx + width + dout)
                          + 2 * width + dout + dim_x)
    cost = pl.CostEstimate(flops=flops, transcendentals=0,
                           bytes_accessed=bytes_accessed)

    full = lambda i: (0, 0)        # small parameter arrays: one resident block
    out2d = pl.pallas_call(
        _kernel,
        out_shape=jax.ShapeDtypeStruct((rows, dout), jnp.float32),
        grid_spec=pltpu.PrefetchScalarGridSpec(
            num_scalar_prefetch=0,
            grid=grid,
            in_specs=[
                pl.BlockSpec((tile_rows, dx), lambda i: (i, 0)),   # x row tile
                pl.BlockSpec(ils.shape, full),
                pl.BlockSpec(w1t.shape, full),
                pl.BlockSpec(b1c.shape, full),
                pl.BlockSpec(w2t.shape, full),
                pl.BlockSpec(b2c.shape, full),
                pl.BlockSpec(w3t.shape, full),
                pl.BlockSpec(b3c.shape, full),
            ],
            out_specs=pl.BlockSpec((tile_rows, dout), lambda i: (i, 0)),
        ),
        compiler_params=pltpu.CompilerParams(
            dimension_semantics=("parallel",),
            vmem_limit_bytes=vmem_limit),
        cost_estimate=cost,
    )(x, ils, w1t, b1c, w2t, b2c, w3t, b3c)

    # Contiguous reshape back to the module's output shape (no HBM copy).
    return out2d.reshape(m, n1, n2, dout)


def init_mlp_params(key, dx, width, dout):
    """PyTorch nn.Linear-style init, deterministic given key."""
    def linear(k, fan_in, fan_out):
        kw, kb = jax.random.split(k)
        bound = 1.0 / jnp.sqrt(fan_in)
        w = jax.random.uniform(kw, (fan_in, fan_out), jnp.float32, -bound, bound)
        b = jax.random.uniform(kb, (1, fan_out), jnp.float32, -bound, bound)
        return w, b

    k1, k2, k3 = jax.random.split(key, 3)
    w1, b1 = linear(k1, dx, width)
    w2, b2 = linear(k2, width, width)
    w3, b3 = linear(k3, width, dout)
    return (w1, b1, w2, b2, w3, b3)


def reference(diff, params, lengthscale, dim_x):
    """Direct port of the PyTorch forward (sum over spatial dims, then square)."""
    w1, b1, w2, b2, w3, b3 = params
    h = jnp.maximum(diff @ w1 + b1[0], 0.0)
    h = jnp.maximum(h @ w2 + b2[0], 0.0)
    dots = h @ w3 + b3[0]
    diff_x = diff[..., -dim_x:]
    dist_x = jnp.sum(diff_x / lengthscale, axis=-1, keepdims=True)
    return -0.5 * dist_x ** 2 + dots


if __name__ == "__main__":
    key = jax.random.PRNGKey(0)
    k_diff, k_par = jax.random.split(key)

    # Small shapes consistent with the module's forward contract.  rows = 512
    # exercises the multi-tile "parallel" grid (>= 2 steps, v7x two-core path).
    m, n1, n2 = 2, 16, 16
    dx = 4              # feature dim of diff
    dim_x = 2           # spatial dims (last dim_x features of diff)
    width = 32          # assumed MLP hidden width
    dout = 16           # MLP output dim
    lengthscale_val = 0.5

    diff = jax.random.normal(k_diff, (m, n1, n2, dx), jnp.float32)
    params = init_mlp_params(k_par, dx, width, dout)
    lengthscale = jnp.full((dim_x,), lengthscale_val, jnp.float32)

    out = spatial_generalisation_mlp_kernel(diff, params, lengthscale, dim_x)
    out = jax.block_until_ready(out)

    ref = reference(diff, params, lengthscale, dim_x)
    assert out.shape == (m, n1, n2, dout)
    # Tolerance allows for TPU default-precision MXU rounding differences
    # between the kernel's transposed matmuls and the plain XLA reference
    # (the squared spatial term is computed exactly in f32 on the VPU).
    assert jnp.allclose(out, ref, atol=2e-3, rtol=2e-3), "mismatch vs reference"

    print("KERNEL_OK")
</pallas_src>

<mosaic_0001>
module attributes {stable_mosaic.version = 11 : i64} {
  func.func @_kernel(%arg0: i32, %arg1: memref<256x4xf32, #tpu.memory_space<vmem>>, %arg2: memref<1x2xf32, #tpu.memory_space<vmem>>, %arg3: memref<32x4xf32, #tpu.memory_space<vmem>>, %arg4: memref<32x1xf32, #tpu.memory_space<vmem>>, %arg5: memref<32x32xf32, #tpu.memory_space<vmem>>, %arg6: memref<32x1xf32, #tpu.memory_space<vmem>>, %arg7: memref<16x32xf32, #tpu.memory_space<vmem>>, %arg8: memref<16x1xf32, #tpu.memory_space<vmem>>, %arg9: memref<256x16xf32, #tpu.memory_space<vmem>>) attributes {dimension_semantics = [#tpu.dimension_semantics<parallel>], iteration_bounds = array<i64: 2>, scalar_prefetch = 0 : i64, scratch_operands = 0 : i64, tpu.core_type = #tpu.core_type<tc>, window_params = [{transform_indices = @transform_0, window_bounds = array<i64: 256, 4>}, {pipeline_mode = #tpu.pipeline_mode<synchronous>, transform_indices = @transform_1, window_bounds = array<i64: 1, 2>}, {pipeline_mode = #tpu.pipeline_mode<synchronous>, transform_indices = @transform_2, window_bounds = array<i64: 32, 4>}, {pipeline_mode = #tpu.pipeline_mode<synchronous>, transform_indices = @transform_3, window_bounds = array<i64: 32, 1>}, {pipeline_mode = #tpu.pipeline_mode<synchronous>, transform_indices = @transform_4, window_bounds = array<i64: 32, 32>}, {pipeline_mode = #tpu.pipeline_mode<synchronous>, transform_indices = @transform_5, window_bounds = array<i64: 32, 1>}, {pipeline_mode = #tpu.pipeline_mode<synchronous>, transform_indices = @transform_6, window_bounds = array<i64: 16, 32>}, {pipeline_mode = #tpu.pipeline_mode<synchronous>, transform_indices = @transform_7, window_bounds = array<i64: 16, 1>}, {transform_indices = @transform_8, window_bounds = array<i64: 256, 16>}]} {
    %c0 = arith.constant 0 : index
    %c0_0 = arith.constant 0 : index
    %0 = vector.load %arg1[%c0, %c0_0] : memref<256x4xf32, #tpu.memory_space<vmem>>, vector<256x4xf32>
    %1 = vector.extract_strided_slice %0 {offsets = [0, 2], sizes = [256, 2], strides = [1, 1]} : vector<256x4xf32> to vector<256x2xf32>
    %c0_1 = arith.constant 0 : index
    %c0_2 = arith.constant 0 : index
    %2 = vector.load %arg2[%c0_1, %c0_2] : memref<1x2xf32, #tpu.memory_space<vmem>>, vector<1x2xf32>
    %3 = vector.broadcast %2 : vector<1x2xf32> to vector<256x2xf32>
    %4 = arith.mulf %1, %3 : vector<256x2xf32>
    %cst = arith.constant dense<0.000000e+00> : vector<256xf32>
    %5 = vector.multi_reduction <add>, %4, %cst [1] : vector<256x2xf32> to vector<256xf32>
    %6 = vector.shape_cast %5 : vector<256xf32> to vector<256x1xf32>
    %cst_3 = arith.constant -5.000000e-01 : f32
    %7 = vector.broadcast %cst_3 : f32 to vector<256x1xf32>
    %8 = arith.mulf %7, %6 : vector<256x1xf32>
    %9 = arith.mulf %8, %6 : vector<256x1xf32>
    %c0_4 = arith.constant 0 : index
    %c0_5 = arith.constant 0 : index
    %10 = vector.load %arg3[%c0_4, %c0_5] : memref<32x4xf32, #tpu.memory_space<vmem>>, vector<32x4xf32>
    %cst_6 = arith.constant dense<0.000000e+00> : vector<32x256xf32>
    %11 = tpu.matmul %10, %0, %cst_6 {dimension_numbers = #tpu.dot_dimension_numbers<[1], [1], [0], [0], [0, 0, 1, 0], [], []>} : vector<32x4xf32>, vector<256x4xf32>, vector<32x256xf32> -> vector<32x256xf32>
    %c0_7 = arith.constant 0 : index
    %c0_8 = arith.constant 0 : index
    %12 = vector.load %arg4[%c0_7, %c0_8] : memref<32x1xf32, #tpu.memory_space<vmem>>, vector<32x1xf32>
    %13 = vector.broadcast %12 : vector<32x1xf32> to vector<32x256xf32>
    %14 = arith.addf %11, %13 : vector<32x256xf32>
    %cst_9 = arith.constant 0.000000e+00 : f32
    %15 = vector.broadcast %cst_9 : f32 to vector<32x256xf32>
    %16 = arith.maximumf %14, %15 : vector<32x256xf32>
    %c0_10 = arith.constant 0 : index
    %c0_11 = arith.constant 0 : index
    %17 = vector.load %arg5[%c0_10, %c0_11] : memref<32x32xf32, #tpu.memory_space<vmem>>, vector<32x32xf32>
    %cst_12 = arith.constant dense<0.000000e+00> : vector<32x256xf32>
    %18 = tpu.matmul %17, %16, %cst_12 {dimension_numbers = #tpu.dot_dimension_numbers<[1], [0], [0], [1], [0, 0, 1, 1], [], []>} : vector<32x32xf32>, vector<32x256xf32>, vector<32x256xf32> -> vector<32x256xf32>
    %c0_13 = arith.constant 0 : index
    %c0_14 = arith.constant 0 : index
    %19 = vector.load %arg6[%c0_13, %c0_14] : memref<32x1xf32, #tpu.memory_space<vmem>>, vector<32x1xf32>
    %20 = vector.broadcast %19 : vector<32x1xf32> to vector<32x256xf32>
    %21 = arith.addf %18, %20 : vector<32x256xf32>
    %cst_15 = arith.constant 0.000000e+00 : f32
    %22 = vector.broadcast %cst_15 : f32 to vector<32x256xf32>
    %23 = arith.maximumf %21, %22 : vector<32x256xf32>
    %c0_16 = arith.constant 0 : index
    %c0_17 = arith.constant 0 : index
    %24 = vector.load %arg7[%c0_16, %c0_17] : memref<16x32xf32, #tpu.memory_space<vmem>>, vector<16x32xf32>
    %cst_18 = arith.constant dense<0.000000e+00> : vector<16x256xf32>
    %25 = tpu.matmul %24, %23, %cst_18 {dimension_numbers = #tpu.dot_dimension_numbers<[1], [0], [0], [1], [0, 0, 1, 1], [], []>} : vector<16x32xf32>, vector<32x256xf32>, vector<16x256xf32> -> vector<16x256xf32>
    %c0_19 = arith.constant 0 : index
    %c0_20 = arith.constant 0 : index
    %26 = vector.load %arg8[%c0_19, %c0_20] : memref<16x1xf32, #tpu.memory_space<vmem>>, vector<16x1xf32>
    %27 = vector.broadcast %26 : vector<16x1xf32> to vector<16x256xf32>
    %28 = arith.addf %25, %27 : vector<16x256xf32>
    %29 = tpu.transpose %28, [1, 0] : vector<16x256xf32> -> vector<256x16xf32>
    %30 = vector.broadcast %9 : vector<256x1xf32> to vector<256x16xf32>
    %31 = arith.addf %29, %30 : vector<256x16xf32>
    %c0_21 = arith.constant 0 : index
    %c0_22 = arith.constant 0 : index
    %32 = vector.load %arg9[%c0_21, %c0_22] : memref<256x16xf32, #tpu.memory_space<vmem>>, vector<256x16xf32>
    tpu.vector_store %arg9[%c0_21, %c0_22], %31 {strides = array<i32>} : memref<256x16xf32, #tpu.memory_space<vmem>>, vector<256x16xf32>,
    return
  }
  func.func @transform_0(%arg0: i32) -> (i32, i32) {
    %c0_i32 = arith.constant 0 : i32
    %c0_i32_0 = arith.constant 0 : i32
    return %arg0, %c0_i32 : i32, i32
  }
  func.func @transform_1(%arg0: i32) -> (i32, i32) {
    %c0_i32 = arith.constant 0 : i32
    %c0_i32_0 = arith.constant 0 : i32
    %c0_i32_1 = arith.constant 0 : i32
    return %c0_i32, %c0_i32_0 : i32, i32
  }
  func.func @transform_2(%arg0: i32) -> (i32, i32) {
    %c0_i32 = arith.constant 0 : i32
    %c0_i32_0 = arith.constant 0 : i32
    %c0_i32_1 = arith.constant 0 : i32
    return %c0_i32, %c0_i32_0 : i32, i32
  }
  func.func @transform_3(%arg0: i32) -> (i32, i32) {
    %c0_i32 = arith.constant 0 : i32
    %c0_i32_0 = arith.constant 0 : i32
    %c0_i32_1 = arith.constant 0 : i32
    return %c0_i32, %c0_i32_0 : i32, i32
  }
  func.func @transform_4(%arg0: i32) -> (i32, i32) {
    %c0_i32 = arith.constant 0 : i32
    %c0_i32_0 = arith.constant 0 : i32
    %c0_i32_1 = arith.constant 0 : i32
    return %c0_i32, %c0_i32_0 : i32, i32
  }
  func.func @transform_5(%arg0: i32) -> (i32, i32) {
    %c0_i32 = arith.constant 0 : i32
    %c0_i32_0 = arith.constant 0 : i32
    %c0_i32_1 = arith.constant 0 : i32
    return %c0_i32, %c0_i32_0 : i32, i32
  }
  func.func @transform_6(%arg0: i32) -> (i32, i32) {
    %c0_i32 = arith.constant 0 : i32
    %c0_i32_0 = arith.constant 0 : i32
    %c0_i32_1 = arith.constant 0 : i32
    return %c0_i32, %c0_i32_0 : i32, i32
  }
  func.func @transform_7(%arg0: i32) -> (i32, i32) {
    %c0_i32 = arith.constant 0 : i32
    %c0_i32_0 = arith.constant 0 : i32
    %c0_i32_1 = arith.constant 0 : i32
    return %c0_i32, %c0_i32_0 : i32, i32
  }
  func.func @transform_8(%arg0: i32) -> (i32, i32) {
    %c0_i32 = arith.constant 0 : i32
    %c0_i32_0 = arith.constant 0 : i32
    return %arg0, %c0_i32 : i32, i32
  }
}

</mosaic_0001>

<llo_original>
// kernel: tpu_custom_call.1
$region0: #{tpu_custom_call.1}
  #allocation0 [shape = 'u32[]', space=smem, size = 0x4, offset = 0x4, fixed_abs, tag = 'smem constant byte address 0x4 - core index']
  #allocation1 [shape = 'u32[144,128]{1,0:T(1,128)}', space=vmem, size = 0x12000, scoped, tag = 'internal scratch']
  %s0 = inlined_call_operand.vmem [shape: f32[512,4], index: 0, kind: input, shape index: {}]
  %s1 = inlined_call_operand.vmem [shape: f32[1,2], index: 1, kind: input, shape index: {}]
  %s2 = inlined_call_operand.vmem [shape: f32[32,4], index: 2, kind: input, shape index: {}]
  %s3 = inlined_call_operand.vmem [shape: f32[32,1], index: 3, kind: input, shape index: {}]
  %s4 = inlined_call_operand.vmem [shape: f32[32,32], index: 4, kind: input, shape index: {}]
  %s5 = inlined_call_operand.vmem [shape: f32[32,1], index: 5, kind: input, shape index: {}]
  %s6 = inlined_call_operand.vmem [shape: f32[16,32], index: 6, kind: input, shape index: {}]
  %s7 = inlined_call_operand.vmem [shape: f32[16,1], index: 7, kind: input, shape index: {}]
  %s8 = inlined_call_operand.vmem [shape: f32[512,16], index: 8, kind: output, shape index: {}]
  %s9 = sld [smem:[#allocation0]]
  $region65: #{tpu_custom_call.1} parent=0
    _
  %s11 = ssub.s32 1, %s9
  %s12 = scalar_select 0, %s11, %s9
  loop: start=0, step=1, limit=4
  $region2: #{tpu_custom_call.1} parent=0 // loop_pre_header
    _
  $region3: #{tpu_custom_call.1} parent=0 // loop_header
    %s14 = sphi 0, %s18
    %p15 = scmp.ge.s32.totalorder %s14, 4
    %s24 = sphi 0, %s26
    %s27 = sphi 0, %s24
    %s28 = sphi 0, %s27
    %s44 = sphi 0, %s28
    %s48 = sphi 0, %s48
    %s50 = sphi 0, %s48
    %s51 = sphi 0, %s50
    %s65 = sphi 0, %s51
    %s69 = sphi 0, %s69
    %s71 = sphi 0, %s69
    %s72 = sphi 0, %s71
    %s86 = sphi 0, %s72
    %s90 = sphi 0, %s90
    %s92 = sphi 0, %s90
    %s93 = sphi 0, %s92
    %s107 = sphi 0, %s93
    %s111 = sphi 0, %s111
    %s113 = sphi 0, %s111
    %s114 = sphi 0, %s113
    %s128 = sphi 0, %s114
    %s132 = sphi 0, %s132
    %s134 = sphi 0, %s132
    %s135 = sphi 0, %s134
    %s149 = sphi 0, %s135
    %s153 = sphi 0, %s153
    %s155 = sphi 0, %s153
    %s156 = sphi 0, %s155
    %s170 = sphi 0, %s156
    %s174 = sphi 0, %s174
    %s176 = sphi 0, %s174
    %s177 = sphi 0, %s176
    %s191 = sphi 0, %s177
    %s197 = sphi 0, %s199
    %s200 = sphi 0, %s197
    %s201 = sphi 0, %s200
    %s217 = sphi 0, %s201
  $region4: #{tpu_custom_call.1} parent=0 // loop_header_branch
    %17 = sbr.rel (%p15) target = $region8
  $region5: #{tpu_custom_call.1} parent=0 // loop_body
    %s19 = ssub.s32 %s14, 1
    %s20 = ssub.s32 %s14, 2
    %s21 = sadd.s32 %s14, 1
    %s22 = ssub.s32 %s14, %s21
    %p23 = scmp.eq.s32.totalorder %s22, 0
    %s25 = sadd.s32 %s24, 1
    %s26 = scalar_select %p23, %s24, %s25
    %p29 = pneg %p23
    %p30 = scmp.eq.s32.totalorder %s14, 1
    %p31 = por %p29, %p30
    %p32 = scmp.ne.s32.totalorder %s24, %s27
    %p33 = scmp.eq.s32.totalorder %s14, 0
    %p34 = por %p32, %p33
    %p35 = scmp.ne.s32.totalorder %s24, %s27
    %p36 = scmp.eq.s32.totalorder %s19, 1
    %p37 = por %p35, %p36
    %p38 = scmp.ne.s32.totalorder %s27, %s28
    %p39 = scmp.eq.s32.totalorder %s19, 0
    %p40 = por %p38, %p39
    %p41 = scmp.ne.s32.totalorder %s27, %s28
    %p42 = scmp.eq.s32.totalorder %s20, 1
    %p43 = por %p41, %p42
    %p45 = scmp.ne.s32.totalorder %s28, %s44
    %p46 = scmp.eq.s32.totalorder %s20, 0
    %p47 = por %p45, %p46
    %s49 = sadd.s32 %s48, 1
    %p52 = scmp.eq.s32.totalorder %s14, 1
    %p53 = scmp.ne.s32.totalorder %s48, %s50
    %p54 = scmp.eq.s32.totalorder %s14, 0
    %p55 = por %p53, %p54
    %p56 = scmp.ne.s32.totalorder %s48, %s50
    %p57 = scmp.eq.s32.totalorder %s19, 1
    %p58 = por %p56, %p57
    %p59 = scmp.ne.s32.totalorder %s50, %s51
    %p60 = scmp.eq.s32.totalorder %s19, 0
    %p61 = por %p59, %p60
    %p62 = scmp.ne.s32.totalorder %s50, %s51
    %p63 = scmp.eq.s32.totalorder %s20, 1
    %p64 = por %p62, %p63
    %p66 = scmp.ne.s32.totalorder %s51, %s65
    %p67 = scmp.eq.s32.totalorder %s20, 0
    %p68 = por %p66, %p67
    %s70 = sadd.s32 %s69, 1
    %p73 = scmp.eq.s32.totalorder %s14, 1
    %p74 = scmp.ne.s32.totalorder %s69, %s71
    %p75 = scmp.eq.s32.totalorder %s14, 0
    %p76 = por %p74, %p75
    %p77 = scmp.ne.s32.totalorder %s69, %s71
    %p78 = scmp.eq.s32.totalorder %s19, 1
    %p79 = por %p77, %p78
    %p80 = scmp.ne.s32.totalorder %s71, %s72
    %p81 = scmp.eq.s32.totalorder %s19, 0
    %p82 = por %p80, %p81
    %p83 = scmp.ne.s32.totalorder %s71, %s72
    %p84 = scmp.eq.s32.totalorder %s20, 1
    %p85 = por %p83, %p84
    %p87 = scmp.ne.s32.totalorder %s72, %s86
    %p88 = scmp.eq.s32.totalorder %s20, 0
    %p89 = por %p87, %p88
    %s91 = sadd.s32 %s90, 1
    %p94 = scmp.eq.s32.totalorder %s14, 1
    %p95 = scmp.ne.s32.totalorder %s90, %s92
    %p96 = scmp.eq.s32.totalorder %s14, 0
    %p97 = por %p95, %p96
    %p98 = scmp.ne.s32.totalorder %s90, %s92
    %p99 = scmp.eq.s32.totalorder %s19, 1
    %p100 = por %p98, %p99
    %p101 = scmp.ne.s32.totalorder %s92, %s93
    %p102 = scmp.eq.s32.totalorder %s19, 0
    %p103 = por %p101, %p102
    %p104 = scmp.ne.s32.totalorder %s92, %s93
    %p105 = scmp.eq.s32.totalorder %s20, 1
    %p106 = por %p104, %p105
    %p108 = scmp.ne.s32.totalorder %s93, %s107
    %p109 = scmp.eq.s32.totalorder %s20, 0
    %p110 = por %p108, %p109
    %s112 = sadd.s32 %s111, 1
    %p115 = scmp.eq.s32.totalorder %s14, 1
    %p116 = scmp.ne.s32.totalorder %s111, %s113
    %p117 = scmp.eq.s32.totalorder %s14, 0
    %p118 = por %p116, %p117
    %p119 = scmp.ne.s32.totalorder %s111, %s113
    %p120 = scmp.eq.s32.totalorder %s19, 1
    %p121 = por %p119, %p120
    %p122 = scmp.ne.s32.totalorder %s113, %s114
    %p123 = scmp.eq.s32.totalorder %s19, 0
    %p124 = por %p122, %p123
    %p125 = scmp.ne.s32.totalorder %s113, %s114
    %p126 = scmp.eq.s32.totalorder %s20, 1
    %p127 = por %p125, %p126
    %p129 = scmp.ne.s32.totalorder %s114, %s128
    %p130 = scmp.eq.s32.totalorder %s20, 0
    %p131 = por %p129, %p130
    %s133 = sadd.s32 %s132, 1
    %p136 = scmp.eq.s32.totalorder %s14, 1
    %p137 = scmp.ne.s32.totalorder %s132, %s134
    %p138 = scmp.eq.s32.totalorder %s14, 0
    %p139 = por %p137, %p138
    %p140 = scmp.ne.s32.totalorder %s132, %s134
    %p141 = scmp.eq.s32.totalorder %s19, 1
    %p142 = por %p140, %p141
    %p143 = scmp.ne.s32.totalorder %s134, %s135
    %p144 = scmp.eq.s32.totalorder %s19, 0
    %p145 = por %p143, %p144
    %p146 = scmp.ne.s32.totalorder %s134, %s135
    %p147 = scmp.eq.s32.totalorder %s20, 1
    %p148 = por %p146, %p147
    %p150 = scmp.ne.s32.totalorder %s135, %s149
    %p151 = scmp.eq.s32.totalorder %s20, 0
    %p152 = por %p150, %p151
    %s154 = sadd.s32 %s153, 1
    %p157 = scmp.eq.s32.totalorder %s14, 1
    %p158 = scmp.ne.s32.totalorder %s153, %s155
    %p159 = scmp.eq.s32.totalorder %s14, 0
    %p160 = por %p158, %p159
    %p161 = scmp.ne.s32.totalorder %s153, %s155
    %p162 = scmp.eq.s32.totalorder %s19, 1
    %p163 = por %p161, %p162
    %p164 = scmp.ne.s32.totalorder %s155, %s156
    %p165 = scmp.eq.s32.totalorder %s19, 0
    %p166 = por %p164, %p165
    %p167 = scmp.ne.s32.totalorder %s155, %s156
    %p168 = scmp.eq.s32.totalorder %s20, 1
    %p169 = por %p167, %p168
    %p171 = scmp.ne.s32.totalorder %s156, %s170
    %p172 = scmp.eq.s32.totalorder %s20, 0
    %p173 = por %p171, %p172
    %s175 = sadd.s32 %s174, 1
    %p178 = scmp.eq.s32.totalorder %s14, 1
    %p179 = scmp.ne.s32.totalorder %s174, %s176
    %p180 = scmp.eq.s32.totalorder %s14, 0
    %p181 = por %p179, %p180
    %p182 = scmp.ne.s32.totalorder %s174, %s176
    %p183 = scmp.eq.s32.totalorder %s19, 1
    %p184 = por %p182, %p183
    %p185 = scmp.ne.s32.totalorder %s176, %s177
    %p186 = scmp.eq.s32.totalorder %s19, 0
    %p187 = por %p185, %p186
    %p188 = scmp.ne.s32.totalorder %s176, %s177
    %p189 = scmp.eq.s32.totalorder %s20, 1
    %p190 = por %p188, %p189
    %p192 = scmp.ne.s32.totalorder %s177, %s191
    %p193 = scmp.eq.s32.totalorder %s20, 0
    %p194 = por %p192, %p193
    %s195 = ssub.s32 %s14, %s21
    %p196 = scmp.eq.s32.totalorder %s195, 0
    %s198 = sadd.s32 %s197, 1
    %s199 = scalar_select %p196, %s197, %s198
    %p202 = pneg %p196
    %p203 = scmp.eq.s32.totalorder %s14, 1
    %p204 = por %p202, %p203
    %p205 = scmp.ne.s32.totalorder %s197, %s200
    %p206 = scmp.eq.s32.totalorder %s14, 0
    %p207 = por %p205, %p206
    %p208 = scmp.ne.s32.totalorder %s197, %s200
    %p209 = scmp.eq.s32.totalorder %s19, 1
    %p210 = por %p208, %p209
    %p211 = scmp.ne.s32.totalorder %s200, %s201
    %p212 = scmp.eq.s32.totalorder %s19, 0
    %p213 = por %p211, %p212
    %p214 = scmp.ne.s32.totalorder %s200, %s201
    %p215 = scmp.eq.s32.totalorder %s20, 1
    %p216 = por %p214, %p215
    %p218 = scmp.ne.s32.totalorder %s201, %s217
    %p219 = scmp.eq.s32.totalorder %s20, 0
    %p220 = por %p218, %p219
    %p221 = scmp.le.s32.totalorder 1, %s14
    %p222 = scmp.lt.s32.totalorder %s14, 3
    %p223 = pnand %p221, %p222
    %p224 = pneg %p223
    // Predicated region
    $region9: #{tpu_custom_call.1} parent=5 // pred_check
      _
    $region10: #{tpu_custom_call.1} parent=5 // pred_check_branch
      %226 = sbr.rel (%p223) target = $region12
    $region11: #{tpu_custom_call.1} parent=5 // pred_region
      %s227 = ssub.s32 %s14, 1
      // Predicated region
      $region13: #{tpu_custom_call.1} parent=11 // pred_check
        %p228 = pneg %p61
      $region14: #{tpu_custom_call.1} parent=11 // pred_check_branch
        %230 = sbr.rel (%p228) target = $region16
      $region15: #{tpu_custom_call.1} parent=11 // pred_region
        _
      $region16: #{tpu_custom_call.1} parent=11 // pred_fallthru
        _
      // Predicated region
      $region17: #{tpu_custom_call.1} parent=11 // pred_check
        %p231 = pneg %p82
      $region18: #{tpu_custom_call.1} parent=11 // pred_check_branch
        %233 = sbr.rel (%p231) target = $region20
      $region19: #{tpu_custom_call.1} parent=11 // pred_region
        _
      $region20: #{tpu_custom_call.1} parent=11 // pred_fallthru
        _
      // Predicated region
      $region21: #{tpu_custom_call.1} parent=11 // pred_check
        %p234 = pneg %p103
      $region22: #{tpu_custom_call.1} parent=11 // pred_check_branch
        %236 = sbr.rel (%p234) target = $region24
      $region23: #{tpu_custom_call.1} parent=11 // pred_region
        _
      $region24: #{tpu_custom_call.1} parent=11 // pred_fallthru
        _
      // Predicated region
      $region25: #{tpu_custom_call.1} parent=11 // pred_check
        %p237 = pneg %p124
      $region26: #{tpu_custom_call.1} parent=11 // pred_check_branch
        %239 = sbr.rel (%p237) target = $region28
      $region27: #{tpu_custom_call.1} parent=11 // pred_region
        _
      $region28: #{tpu_custom_call.1} parent=11 // pred_fallthru
        _
      // Predicated region
      $region29: #{tpu_custom_call.1} parent=11 // pred_check
        %p240 = pneg %p145
      $region30: #{tpu_custom_call.1} parent=11 // pred_check_branch
        %242 = sbr.rel (%p240) target = $region32
      $region31: #{tpu_custom_call.1} parent=11 // pred_region
        _
      $region32: #{tpu_custom_call.1} parent=11 // pred_fallthru
        _
      // Predicated region
      $region33: #{tpu_custom_call.1} parent=11 // pred_check
        %p243 = pneg %p166
      $region34: #{tpu_custom_call.1} parent=11 // pred_check_branch
        %245 = sbr.rel (%p243) target = $region36
      $region35: #{tpu_custom_call.1} parent=11 // pred_region
        _
      $region36: #{tpu_custom_call.1} parent=11 // pred_fallthru
        _
      // Predicated region
      $region37: #{tpu_custom_call.1} parent=11 // pred_check
        %p246 = pneg %p187
      $region38: #{tpu_custom_call.1} parent=11 // pred_check_branch
        %248 = sbr.rel (%p246) target = $region40
      $region39: #{tpu_custom_call.1} parent=11 // pred_region
        _
      $region40: #{tpu_custom_call.1} parent=11 // pred_fallthru
        _
    $region12: #{tpu_custom_call.1} parent=5 // pred_fallthru
      _
    %p249 = scmp.lt.s32.totalorder %s14, 2
    // Predicated region
    $region41: #{tpu_custom_call.1} parent=5 // pred_check
      %p250 = pneg %p249
    $region42: #{tpu_custom_call.1} parent=5 // pred_check_branch
      %252 = sbr.rel (%p250) target = $region44
    $region43: #{tpu_custom_call.1} parent=5 // pred_region
      // Predicated region
      $region45: #{tpu_custom_call.1} parent=43 // pred_check
        %p253 = pneg %p34
      $region46: #{tpu_custom_call.1} parent=43 // pred_check_branch
        %255 = sbr.rel (%p253) target = $region48
      $region47: #{tpu_custom_call.1} parent=43 // pred_region
        %s256 = smul.u32 32, %s14
        %p257 = scmp.lt.s32.totalorder %s256, 63
        %s258 = scalar_select %p257, %s256, 63
        %s259 = smul.addr %s258, 8
        %s260 = scalar_lea.vmem %s0, %s259
        %s261 = smul.u32 32, %s14
      $region48: #{tpu_custom_call.1} parent=43 // pred_fallthru
        _
    $region44: #{tpu_custom_call.1} parent=5 // pred_fallthru
      _
    %p262 = scmp.le.s32.totalorder 1, %s14
    %p263 = scmp.lt.s32.totalorder %s14, 3
    %p264 = pnand %p262, %p263
    %p265 = pneg %p264
    // Predicated region
    $region49: #{tpu_custom_call.1} parent=5 // pred_check
      _
    $region50: #{tpu_custom_call.1} parent=5 // pred_check_branch
      %267 = sbr.rel (%p264) target = $region52
    $region51: #{tpu_custom_call.1} parent=5 // pred_region
      %s268 = ssub.s32 %s14, 1
      %s269 = smul.u32 32, %s19
      %p270 = scmp.lt.s32.totalorder %s269, 63
      %s271 = scalar_select %p270, %s269, 63
      %s272 = smul.addr %s271, 8
      %s273 = scalar_lea.vmem %s0, %s272
      %p274 = pneg %p40
      %p275 = pneg %p37
      %p276 = pneg %p61
      %p277 = pneg %p58
      %p278 = pneg %p82
      %p279 = pneg %p79
      %p280 = pneg %p103
      %p281 = pneg %p100
      %p282 = pneg %p124
      %p283 = pneg %p121
      %p284 = pneg %p145
      %p285 = pneg %p142
      %p286 = pneg %p166
      %p287 = pneg %p163
      %p288 = pneg %p187
      %p289 = pneg %p184
      %p290 = pneg %p213
      %p291 = pneg %p210
      %s292 = smul.u32 32, %s19
      %p293 = scmp.lt.s32.totalorder %s292, 63
      %s294 = scalar_select %p293, %s292, 63
      %s295 = smul.addr %s294, 8
      %s296 = scalar_lea.vmem %s8, %s295
      %s297 = smul.u32 32, %s19
      %p298 = scmp.lt.s32.totalorder %s297, 63
      %s299 = scalar_select %p298, %s297, 63
      %s300 = smul.addr %s299, 8
      %s301 = scalar_lea.vmem %s0, %s300
      %s302 = smul.u32 32, %s19
      %s303 = smul.u32 32, %s19
      %p304 = scmp.lt.s32.totalorder %s303, 63
      %s305 = scalar_select %p304, %s303, 63
      %s306 = smul.addr %s305, 8
      %s307 = scalar_lea.vmem %s8, %s306
      %s308 = smul.u32 32, %s19
      %v309 = vld [vmem:[%s301] sm:$0xff]
      %v310 = vld [vmem:[%s301 + $0x8] sm:$0xff]
      %v311 = vld [vmem:[%s301 + $0x10] sm:$0xff]
      %v312 = vld [vmem:[%s301 + $0x18] sm:$0xff]
      %v313 = vld [vmem:[%s301 + $0x20] sm:$0xff]
      %v314 = vld [vmem:[%s301 + $0x28] sm:$0xff]
      %v315 = vld [vmem:[%s301 + $0x30] sm:$0xff]
      %v316 = vld [vmem:[%s301 + $0x38] sm:$0xff]
      %v317 = vld [vmem:[%s301 + $0x40] sm:$0xff]
      %v318 = vld [vmem:[%s301 + $0x48] sm:$0xff]
      %v319 = vld [vmem:[%s301 + $0x50] sm:$0xff]
      %v320 = vld [vmem:[%s301 + $0x58] sm:$0xff]
      %v321 = vld [vmem:[%s301 + $0x60] sm:$0xff]
      %v322 = vld [vmem:[%s301 + $0x68] sm:$0xff]
      %v323 = vld [vmem:[%s301 + $0x70] sm:$0xff]
      %v324 = vld [vmem:[%s301 + $0x78] sm:$0xff]
      %v325 = vld [vmem:[%s301 + $0x80] sm:$0xff]
      %v326 = vld [vmem:[%s301 + $0x88] sm:$0xff]
      %v327 = vld [vmem:[%s301 + $0x90] sm:$0xff]
      %v328 = vld [vmem:[%s301 + $0x98] sm:$0xff]
      %v329 = vld [vmem:[%s301 + $0xa0] sm:$0xff]
      %v330 = vld [vmem:[%s301 + $0xa8] sm:$0xff]
      %v331 = vld [vmem:[%s301 + $0xb0] sm:$0xff]
      %v332 = vld [vmem:[%s301 + $0xb8] sm:$0xff]
      %v333 = vld [vmem:[%s301 + $0xc0] sm:$0xff]
      %v334 = vld [vmem:[%s301 + $0xc8] sm:$0xff]
      %v335 = vld [vmem:[%s301 + $0xd0] sm:$0xff]
      %v336 = vld [vmem:[%s301 + $0xd8] sm:$0xff]
      %v337 = vld [vmem:[%s301 + $0xe0] sm:$0xff]
      %v338 = vld [vmem:[%s301 + $0xe8] sm:$0xff]
      %v339 = vld [vmem:[%s301 + $0xf0] sm:$0xff]
      %v340 = vld [vmem:[%s301 + $0xf8] sm:$0xff]
      %v341 = vld [vmem:[%s1] sm:$0x1]
      %v343 = vlaneseq
      %v344 = vshrl.u32 %v343, 7
      %v345 = vsub.s32 0, %v344
      %v346 = vrot.slane %v341, %v345
      %347 = vrot.lane.b32.xlu0 %v346, 2
      %v348 = vpop.permute.xlu0 %347
      %v350 = vmul.f32 %v309, %v348
      %v351 = vmul.f32 %v310, %v348
      %v352 = vmul.f32 %v311, %v348
      %v353 = vmul.f32 %v312, %v348
      %v354 = vmul.f32 %v313, %v348
      %v355 = vmul.f32 %v314, %v348
      %v356 = vmul.f32 %v315, %v348
      %v357 = vmul.f32 %v316, %v348
      %v358 = vmul.f32 %v317, %v348
      %v359 = vmul.f32 %v318, %v348
      %v360 = vmul.f32 %v319, %v348
      %v361 = vmul.f32 %v320, %v348
      %v362 = vmul.f32 %v321, %v348
      %v363 = vmul.f32 %v322, %v348
      %v364 = vmul.f32 %v323, %v348
      %v365 = vmul.f32 %v324, %v348
      %v366 = vmul.f32 %v325, %v348
      %v367 = vmul.f32 %v326, %v348
      %v368 = vmul.f32 %v327, %v348
      %v369 = vmul.f32 %v328, %v348
      %v370 = vmul.f32 %v329, %v348
      %v371 = vmul.f32 %v330, %v348
      %v372 = vmul.f32 %v331, %v348
      %v373 = vmul.f32 %v332, %v348
      %v374 = vmul.f32 %v333, %v348
      %v375 = vmul.f32 %v334, %v348
      %v376 = vmul.f32 %v335, %v348
      %v377 = vmul.f32 %v336, %v348
      %v378 = vmul.f32 %v337, %v348
      %v379 = vmul.f32 %v338, %v348
      %v380 = vmul.f32 %v339, %v348
      %v381 = vmul.f32 %v340, %v348
      %414 = vrot.lane.b32.xlu0 %v350, 126
      %v415 = vpop.permute.xlu0 %414
      %416 = vrot.lane.b32.xlu0 %v351, 126
      %v417 = vpop.permute.xlu0 %416
      %418 = vrot.lane.b32.xlu0 %v352, 126
      %v419 = vpop.permute.xlu0 %418
      %420 = vrot.lane.b32.xlu0 %v353, 126
      %v421 = vpop.permute.xlu0 %420
      %422 = vrot.lane.b32.xlu0 %v354, 126
      %v423 = vpop.permute.xlu0 %422
      %424 = vrot.lane.b32.xlu0 %v355, 126
      %v425 = vpop.permute.xlu0 %424
      %426 = vrot.lane.b32.xlu0 %v356, 126
      %v427 = vpop.permute.xlu0 %426
      %428 = vrot.lane.b32.xlu0 %v357, 126
      %v429 = vpop.permute.xlu0 %428
      %430 = vrot.lane.b32.xlu0 %v358, 126
      %v431 = vpop.permute.xlu0 %430
      %432 = vrot.lane.b32.xlu0 %v359, 126
      %v433 = vpop.permute.xlu0 %432
      %434 = vrot.lane.b32.xlu0 %v360, 126
      %v435 = vpop.permute.xlu0 %434
      %436 = vrot.lane.b32.xlu0 %v361, 126
      %v437 = vpop.permute.xlu0 %436
      %438 = vrot.lane.b32.xlu0 %v362, 126
      %v439 = vpop.permute.xlu0 %438
      %440 = vrot.lane.b32.xlu0 %v363, 126
      %v441 = vpop.permute.xlu0 %440
      %442 = vrot.lane.b32.xlu0 %v364, 126
      %v443 = vpop.permute.xlu0 %442
      %444 = vrot.lane.b32.xlu0 %v365, 126
      %v445 = vpop.permute.xlu0 %444
      %446 = vrot.lane.b32.xlu0 %v366, 126
      %v447 = vpop.permute.xlu0 %446
      %448 = vrot.lane.b32.xlu0 %v367, 126
      %v449 = vpop.permute.xlu0 %448
      %450 = vrot.lane.b32.xlu0 %v368, 126
      %v451 = vpop.permute.xlu0 %450
      %452 = vrot.lane.b32.xlu0 %v369, 126
      %v453 = vpop.permute.xlu0 %452
      %454 = vrot.lane.b32.xlu0 %v370, 126
      %v455 = vpop.permute.xlu0 %454
      %456 = vrot.lane.b32.xlu0 %v371, 126
      %v457 = vpop.permute.xlu0 %456
      %458 = vrot.lane.b32.xlu0 %v372, 126
      %v459 = vpop.permute.xlu0 %458
      %460 = vrot.lane.b32.xlu0 %v373, 126
      %v461 = vpop.permute.xlu0 %460
      %462 = vrot.lane.b32.xlu0 %v374, 126
      %v463 = vpop.permute.xlu0 %462
      %464 = vrot.lane.b32.xlu0 %v375, 126
      %v465 = vpop.permute.xlu0 %464
      %466 = vrot.lane.b32.xlu0 %v376, 126
      %v467 = vpop.permute.xlu0 %466
      %468 = vrot.lane.b32.xlu0 %v377, 126
      %v469 = vpop.permute.xlu0 %468
      %470 = vrot.lane.b32.xlu0 %v378, 126
      %v471 = vpop.permute.xlu0 %470
      %472 = vrot.lane.b32.xlu0 %v379, 126
      %v473 = vpop.permute.xlu0 %472
      %474 = vrot.lane.b32.xlu0 %v380, 126
      %v475 = vpop.permute.xlu0 %474
      %476 = vrot.lane.b32.xlu0 %v381, 126
      %v477 = vpop.permute.xlu0 %476
      %vm510 = vcmask 15360
      %v511 = vsel %vm510, %v415, 0.0
      %512 = vadd.xlane.f32.xlu0 %v511
      %v513 = vpop.xlane.xlu0 %512
      %v514 = vsel %vm510, %v417, 0.0
      %515 = vadd.xlane.f32.xlu0 %v514
      %v516 = vpop.xlane.xlu0 %515
      %v517 = vsel %vm510, %v419, 0.0
      %518 = vadd.xlane.f32.xlu0 %v517
      %v519 = vpop.xlane.xlu0 %518
      %v520 = vsel %vm510, %v421, 0.0
      %521 = vadd.xlane.f32.xlu0 %v520
      %v522 = vpop.xlane.xlu0 %521
      %v523 = vsel %vm510, %v423, 0.0
      %524 = vadd.xlane.f32.xlu0 %v523
      %v525 = vpop.xlane.xlu0 %524
      %v526 = vsel %vm510, %v425, 0.0
      %527 = vadd.xlane.f32.xlu0 %v526
      %v528 = vpop.xlane.xlu0 %527
      %v529 = vsel %vm510, %v427, 0.0
      %530 = vadd.xlane.f32.xlu0 %v529
      %v531 = vpop.xlane.xlu0 %530
      %v532 = vsel %vm510, %v429, 0.0
      %533 = vadd.xlane.f32.xlu0 %v532
      %v534 = vpop.xlane.xlu0 %533
      %v535 = vsel %vm510, %v431, 0.0
      %536 = vadd.xlane.f32.xlu0 %v535
      %v537 = vpop.xlane.xlu0 %536
      %v538 = vsel %vm510, %v433, 0.0
      %539 = vadd.xlane.f32.xlu0 %v538
      %v540 = vpop.xlane.xlu0 %539
      %v541 = vsel %vm510, %v435, 0.0
      %542 = vadd.xlane.f32.xlu0 %v541
      %v543 = vpop.xlane.xlu0 %542
      %v544 = vsel %vm510, %v437, 0.0
      %545 = vadd.xlane.f32.xlu0 %v544
      %v546 = vpop.xlane.xlu0 %545
      %v547 = vsel %vm510, %v439, 0.0
      %548 = vadd.xlane.f32.xlu0 %v547
      %v549 = vpop.xlane.xlu0 %548
      %v550 = vsel %vm510, %v441, 0.0
      %551 = vadd.xlane.f32.xlu0 %v550
      %v552 = vpop.xlane.xlu0 %551
      %v553 = vsel %vm510, %v443, 0.0
      %554 = vadd.xlane.f32.xlu0 %v553
      %v555 = vpop.xlane.xlu0 %554
      %v556 = vsel %vm510, %v445, 0.0
      %557 = vadd.xlane.f32.xlu0 %v556
      %v558 = vpop.xlane.xlu0 %557
      %v559 = vsel %vm510, %v447, 0.0
      %560 = vadd.xlane.f32.xlu0 %v559
      %v561 = vpop.xlane.xlu0 %560
      %v562 = vsel %vm510, %v449, 0.0
      %563 = vadd.xlane.f32.xlu0 %v562
      %v564 = vpop.xlane.xlu0 %563
      %v565 = vsel %vm510, %v451, 0.0
      %566 = vadd.xlane.f32.xlu0 %v565
      %v567 = vpop.xlane.xlu0 %566
      %v568 = vsel %vm510, %v453, 0.0
      %569 = vadd.xlane.f32.xlu0 %v568
      %v570 = vpop.xlane.xlu0 %569
      %v571 = vsel %vm510, %v455, 0.0
      %572 = vadd.xlane.f32.xlu0 %v571
      %v573 = vpop.xlane.xlu0 %572
      %v574 = vsel %vm510, %v457, 0.0
      %575 = vadd.xlane.f32.xlu0 %v574
      %v576 = vpop.xlane.xlu0 %575
      %v577 = vsel %vm510, %v459, 0.0
      %578 = vadd.xlane.f32.xlu0 %v577
      %v579 = vpop.xlane.xlu0 %578
      %v580 = vsel %vm510, %v461, 0.0
      %581 = vadd.xlane.f32.xlu0 %v580
      %v582 = vpop.xlane.xlu0 %581
      %v583 = vsel %vm510, %v463, 0.0
      %584 = vadd.xlane.f32.xlu0 %v583
      %v585 = vpop.xlane.xlu0 %584
      %v586 = vsel %vm510, %v465, 0.0
      %587 = vadd.xlane.f32.xlu0 %v586
      %v588 = vpop.xlane.xlu0 %587
      %v589 = vsel %vm510, %v467, 0.0
      %590 = vadd.xlane.f32.xlu0 %v589
      %v591 = vpop.xlane.xlu0 %590
      %v592 = vsel %vm510, %v469, 0.0
      %593 = vadd.xlane.f32.xlu0 %v592
      %v594 = vpop.xlane.xlu0 %593
      %v595 = vsel %vm510, %v471, 0.0
      %596 = vadd.xlane.f32.xlu0 %v595
      %v597 = vpop.xlane.xlu0 %596
      %v598 = vsel %vm510, %v473, 0.0
      %599 = vadd.xlane.f32.xlu0 %v598
      %v600 = vpop.xlane.xlu0 %599
      %v601 = vsel %vm510, %v475, 0.0
      %602 = vadd.xlane.f32.xlu0 %v601
      %v603 = vpop.xlane.xlu0 %602
      %v604 = vsel %vm510, %v477, 0.0
      %605 = vadd.xlane.f32.xlu0 %v604
      %v606 = vpop.xlane.xlu0 %605
      %v607 = vmul.f32 %v513, -0.5
      %v608 = vmul.f32 %v516, -0.5
      %v609 = vmul.f32 %v519, -0.5
      %v610 = vmul.f32 %v522, -0.5
      %v611 = vmul.f32 %v525, -0.5
      %v612 = vmul.f32 %v528, -0.5
      %v613 = vmul.f32 %v531, -0.5
      %v614 = vmul.f32 %v534, -0.5
      %v615 = vmul.f32 %v537, -0.5
      %v616 = vmul.f32 %v540, -0.5
      %v617 = vmul.f32 %v543, -0.5
      %v618 = vmul.f32 %v546, -0.5
      %v619 = vmul.f32 %v549, -0.5
      %v620 = vmul.f32 %v552, -0.5
      %v621 = vmul.f32 %v555, -0.5
      %v622 = vmul.f32 %v558, -0.5
      %v623 = vmul.f32 %v561, -0.5
      %v624 = vmul.f32 %v564, -0.5
      %v625 = vmul.f32 %v567, -0.5
      %v626 = vmul.f32 %v570, -0.5
      %v627 = vmul.f32 %v573, -0.5
      %v628 = vmul.f32 %v576, -0.5
      %v629 = vmul.f32 %v579, -0.5
      %v630 = vmul.f32 %v582, -0.5
      %v631 = vmul.f32 %v585, -0.5
      %v632 = vmul.f32 %v588, -0.5
      %v633 = vmul.f32 %v591, -0.5
      %v634 = vmul.f32 %v594, -0.5
      %v635 = vmul.f32 %v597, -0.5
      %v636 = vmul.f32 %v600, -0.5
      %v637 = vmul.f32 %v603, -0.5
      %v638 = vmul.f32 %v606, -0.5
      %v639 = vmul.f32 %v607, %v513
      %v640 = vmul.f32 %v608, %v516
      %v641 = vmul.f32 %v609, %v519
      %v642 = vmul.f32 %v610, %v522
      %v643 = vmul.f32 %v611, %v525
      %v644 = vmul.f32 %v612, %v528
      %v645 = vmul.f32 %v613, %v531
      %v646 = vmul.f32 %v614, %v534
      %v647 = vmul.f32 %v615, %v537
      %v648 = vmul.f32 %v616, %v540
      %v649 = vmul.f32 %v617, %v543
      %v650 = vmul.f32 %v618, %v546
      %v651 = vmul.f32 %v619, %v549
      %v652 = vmul.f32 %v620, %v552
      %v653 = vmul.f32 %v621, %v555
      %v654 = vmul.f32 %v622, %v558
      %v655 = vmul.f32 %v623, %v561
      %v656 = vmul.f32 %v624, %v564
      %v657 = vmul.f32 %v625, %v567
      %v658 = vmul.f32 %v626, %v570
      %v659 = vmul.f32 %v627, %v573
      %v660 = vmul.f32 %v628, %v576
      %v661 = vmul.f32 %v629, %v579
      %v662 = vmul.f32 %v630, %v582
      %v663 = vmul.f32 %v631, %v585
      %v664 = vmul.f32 %v632, %v588
      %v665 = vmul.f32 %v633, %v591
      %v666 = vmul.f32 %v634, %v594
      %v667 = vmul.f32 %v635, %v597
      %v668 = vmul.f32 %v636, %v600
      %v669 = vmul.f32 %v637, %v603
      %v670 = vmul.f32 %v638, %v606
      %v671 = vld [vmem:[%s2] sm:$0xff]
      %v672 = vld [vmem:[%s2 + $0x8] sm:$0xff]
      %v673 = vld [vmem:[%s2 + $0x10] sm:$0xff]
      %v674 = vld [vmem:[%s2 + $0x18] sm:$0xff]
      %v675 = vld [vmem:[%s3] sm:$0xff]
      %v676 = vld [vmem:[%s3 + $0x8] sm:$0xff]
      %v677 = vld [vmem:[%s3 + $0x10] sm:$0xff]
      %v678 = vld [vmem:[%s3 + $0x18] sm:$0xff]
      %680 = vset.pattern.permute.xlu0 0
      %681 = vperm.xlu0 %680, %v675
      %v682 = vpop.permute.xlu0 %681
      %685 = vset.pattern.permute.xlu0 0
      %686 = vperm.xlu0 %685, %v676
      %v687 = vpop.permute.xlu0 %686
      %690 = vset.pattern.permute.xlu0 0
      %691 = vperm.xlu0 %690, %v677
      %v692 = vpop.permute.xlu0 %691
      %695 = vset.pattern.permute.xlu0 0
      %696 = vperm.xlu0 %695, %v678
      %v697 = vpop.permute.xlu0 %696
      %vm699 = vcmask 31744
      %v701 = vsel %vm699, %v671, 0
      %v704 = vsel %vm699, %v672, 0
      %v707 = vsel %vm699, %v673, 0
      %v710 = vsel %vm699, %v674, 0
      %v713 = vsel %vm699, %v309, 0
      %v716 = vsel %vm699, %v310, 0
      %v719 = vsel %vm699, %v311, 0
      %v722 = vsel %vm699, %v312, 0
      %v725 = vsel %vm699, %v313, 0
      %v728 = vsel %vm699, %v314, 0
      %v731 = vsel %vm699, %v315, 0
      %v734 = vsel %vm699, %v316, 0
      %v737 = vsel %vm699, %v317, 0
      %v740 = vsel %vm699, %v318, 0
      %v743 = vsel %vm699, %v319, 0
      %v746 = vsel %vm699, %v320, 0
      %v749 = vsel %vm699, %v321, 0
      %v752 = vsel %vm699, %v322, 0
      %v755 = vsel %vm699, %v323, 0
      %v758 = vsel %vm699, %v324, 0
      %v761 = vsel %vm699, %v325, 0
      %v764 = vsel %vm699, %v326, 0
      %v767 = vsel %vm699, %v327, 0
      %v770 = vsel %vm699, %v328, 0
      %v773 = vsel %vm699, %v329, 0
      %v776 = vsel %vm699, %v330, 0
      %v779 = vsel %vm699, %v331, 0
      %v782 = vsel %vm699, %v332, 0
      %v785 = vsel %vm699, %v333, 0
      %v788 = vsel %vm699, %v334, 0
      %v791 = vsel %vm699, %v335, 0
      %v794 = vsel %vm699, %v336, 0
      %v797 = vsel %vm699, %v337, 0
      %v800 = vsel %vm699, %v338, 0
      %v803 = vsel %vm699, %v339, 0
      %v806 = vsel %vm699, %v340, 0
      %808 = vmatprep.subr.mxu0 0.0
      %809 = vmatpush1.xpose.msra.mxu0 %v713
      %810 = vmatprep.subr.mxu0 0.0
      %811 = vmatpush1.xpose.msra.mxu0 %v716
      %812 = vmatprep.subr.mxu0 0.0
      %813 = vmatpush1.xpose.msra.mxu0 %v719
      %814 = vmatprep.subr.mxu0 0.0
      %815 = vmatpush1.xpose.msra.mxu0 %v722
      %816 = vmatprep.subr.mxu0 0.0
      %817 = vmatpush1.xpose.msra.mxu0 %v725
      %818 = vmatprep.subr.mxu0 0.0
      %819 = vmatpush1.xpose.msra.mxu0 %v728
      %820 = vmatprep.subr.mxu0 0.0
      %821 = vmatpush1.xpose.msra.mxu0 %v731
      %822 = vmatprep.subr.mxu0 0.0
      %823 = vmatpush1.xpose.msra.mxu0 %v734
      %824 = vmatprep.subr.mxu0 0.0
      %825 = vmatpush1.xpose.msra.mxu0 %v737
      %826 = vmatprep.subr.mxu0 0.0
      %827 = vmatpush1.xpose.msra.mxu0 %v740
      %828 = vmatprep.subr.mxu0 0.0
      %829 = vmatpush1.xpose.msra.mxu0 %v743
      %830 = vmatprep.subr.mxu0 0.0
      %831 = vmatpush1.xpose.msra.mxu0 %v746
      %832 = vmatprep.subr.mxu0 0.0
      %833 = vmatpush1.xpose.msra.mxu0 %v749
      %834 = vmatprep.subr.mxu0 0.0
      %835 = vmatpush1.xpose.msra.mxu0 %v752
      %836 = vmatprep.subr.mxu0 0.0
      %837 = vmatpush1.xpose.msra.mxu0 %v755
      %838 = vmatprep.subr.mxu0 0.0
      %839 = vmatpush1.xpose.msra.mxu0 %v758
      %840 = vmatprep.subr.mxu0 0.0
      %841 = vmatpush1.xpose.msra.mxu0 %v761
      %842 = vmatprep.subr.mxu0 0.0
      %843 = vmatpush1.xpose.msra.mxu0 %v764
      %844 = vmatprep.subr.mxu0 0.0
      %845 = vmatpush1.xpose.msra.mxu0 %v767
      %846 = vmatprep.subr.mxu0 0.0
      %847 = vmatpush1.xpose.msra.mxu0 %v770
      %848 = vmatprep.subr.mxu0 0.0
      %849 = vmatpush1.xpose.msra.mxu0 %v773
      %850 = vmatprep.subr.mxu0 0.0
      %851 = vmatpush1.xpose.msra.mxu0 %v776
      %852 = vmatprep.subr.mxu0 0.0
      %853 = vmatpush1.xpose.msra.mxu0 %v779
      %854 = vmatprep.subr.mxu0 0.0
      %855 = vmatpush1.xpose.msra.mxu0 %v782
      %856 = vmatprep.subr.mxu0 0.0
      %857 = vmatpush1.xpose.msra.mxu0 %v785
      %858 = vmatprep.subr.mxu0 0.0
      %859 = vmatpush1.xpose.msra.mxu0 %v788
      %860 = vmatprep.subr.mxu0 0.0
      %861 = vmatpush1.xpose.msra.mxu0 %v791
      %862 = vmatprep.subr.mxu0 0.0
      %863 = vmatpush1.xpose.msra.mxu0 %v794
      %864 = vmatprep.subr.mxu0 0.0
      %865 = vmatpush1.xpose.msra.mxu0 %v797
      %866 = vmatprep.subr.mxu0 0.0
      %867 = vmatpush1.xpose.msra.mxu0 %v800
      %868 = vmatprep.subr.mxu0 0.0
      %869 = vmatpush1.xpose.msra.mxu0 %v803
      %870 = vmatprep.subr.mxu0 0.0
      %871 = vmatpush1.xpose.msra.mxu0 %v806
      %872 = vmatprep.mubr.f32.mxu0 0.0
      %873 = vmatmul.mubr.f32.gmra.mrb[0].mxu0 %v701
      %v874 = vpop.f32.mrb[0].mxu0
      %v875 = vadd.f32 %v682, %v874
      %v876 = vpop.f32.mrb[0].mxu0
      %v877 = vadd.f32 %v682, %v876
      %878 = vmatprep.mubr.f32.mxu0 0.0
      %879 = vmatmul.mubr.f32.gmra.mrb[0].mxu0 %v704
      %v880 = vpop.f32.mrb[0].mxu0
      %v881 = vadd.f32 %v687, %v880
      %v882 = vpop.f32.mrb[0].mxu0
      %v883 = vadd.f32 %v687, %v882
      %884 = vmatprep.mubr.f32.mxu0 0.0
      %885 = vmatmul.mubr.f32.gmra.mrb[0].mxu0 %v707
      %v886 = vpop.f32.mrb[0].mxu0
      %v887 = vadd.f32 %v692, %v886
      %v888 = vpop.f32.mrb[0].mxu0
      %v889 = vadd.f32 %v692, %v888
      %890 = vmatprep.mubr.f32.mxu0 0.0
      %891 = vmatmul.mubr.f32.gmra.mrb[0].mxu0 %v710
      %v892 = vpop.f32.mrb[0].mxu0
      %v893 = vadd.f32 %v697, %v892
      %v894 = vpop.f32.mrb[0].mxu0
      %v895 = vadd.f32 %v697, %v894
      %896 = vdwg.mxu0
      %v897 = vmax.f32 %v875, 0.0
      %v898 = vmax.f32 %v877, 0.0
      %v899 = vmax.f32 %v881, 0.0
      %v900 = vmax.f32 %v883, 0.0
      %v901 = vmax.f32 %v887, 0.0
      %v902 = vmax.f32 %v889, 0.0
      %v903 = vmax.f32 %v893, 0.0
      %v904 = vmax.f32 %v895, 0.0
      %v905 = vld [vmem:[%s4] sm:$0xff]
      %v906 = vld [vmem:[%s4 + $0x8] sm:$0xff]
      %v907 = vld [vmem:[%s4 + $0x10] sm:$0xff]
      %v908 = vld [vmem:[%s4 + $0x18] sm:$0xff]
      %v909 = vld [vmem:[%s5] sm:$0xff]
      %v910 = vld [vmem:[%s5 + $0x8] sm:$0xff]
      %v911 = vld [vmem:[%s5 + $0x10] sm:$0xff]
      %v912 = vld [vmem:[%s5 + $0x18] sm:$0xff]
      %914 = vset.pattern.permute.xlu0 0
      %915 = vperm.xlu0 %914, %v909
      %v916 = vpop.permute.xlu0 %915
      %919 = vset.pattern.permute.xlu0 0
      %920 = vperm.xlu0 %919, %v910
      %v921 = vpop.permute.xlu0 %920
      %924 = vset.pattern.permute.xlu0 0
      %925 = vperm.xlu0 %924, %v911
      %v926 = vpop.permute.xlu0 %925
      %929 = vset.pattern.permute.xlu0 0
      %930 = vperm.xlu0 %929, %v912
      %v931 = vpop.permute.xlu0 %930
      %vm933 = vcmask 261120
      %v935 = vsel %vm933, %v905, 0
      %v938 = vsel %vm933, %v906, 0
      %v941 = vsel %vm933, %v907, 0
      %v944 = vsel %vm933, %v908, 0
      %946 = vmatprep.subr.mxu0 %v898
      %947 = vmatpush1.msra.mxu0 %v897
      %948 = vmatprep.subr.mxu0 %v900
      %949 = vmatpush1.msra.mxu0 %v899
      %950 = vmatprep.subr.mxu0 %v902
      %951 = vmatpush1.msra.mxu0 %v901
      %952 = vmatprep.subr.mxu0 %v904
      %953 = vmatpush1.msra.mxu0 %v903
      %954 = vmatprep.subr.mxu0 0.0
      %955 = vmatpush1.msra.mxu0 0.0
      %956 = vmatprep.subr.mxu0 0.0
      %957 = vmatpush1.msra.mxu0 0.0
      %958 = vmatprep.subr.mxu0 0.0
      %959 = vmatpush1.msra.mxu0 0.0
      %960 = vmatprep.subr.mxu0 0.0
      %961 = vmatpush1.msra.mxu0 0.0
      %962 = vmatprep.subr.mxu0 0.0
      %963 = vmatpush1.msra.mxu0 0.0
      %964 = vmatprep.subr.mxu0 0.0
      %965 = vmatpush1.msra.mxu0 0.0
      %966 = vmatprep.subr.mxu0 0.0
      %967 = vmatpush1.msra.mxu0 0.0
      %968 = vmatprep.subr.mxu0 0.0
      %969 = vmatpush1.msra.mxu0 0.0
      %970 = vmatprep.subr.mxu0 0.0
      %971 = vmatpush1.msra.mxu0 0.0
      %972 = vmatprep.subr.mxu0 0.0
      %973 = vmatpush1.msra.mxu0 0.0
      %974 = vmatprep.subr.mxu0 0.0
      %975 = vmatpush1.msra.mxu0 0.0
      %976 = vmatprep.subr.mxu0 0.0
      %977 = vmatpush1.msra.mxu0 0.0
      %978 = vmatprep.subr.mxu0 0.0
      %979 = vmatpush1.msra.mxu0 0.0
      %980 = vmatprep.subr.mxu0 0.0
      %981 = vmatpush1.msra.mxu0 0.0
      %982 = vmatprep.subr.mxu0 0.0
      %983 = vmatpush1.msra.mxu0 0.0
      %984 = vmatprep.subr.mxu0 0.0
      %985 = vmatpush1.msra.mxu0 0.0
      %986 = vmatprep.subr.mxu0 0.0
      %987 = vmatpush1.msra.mxu0 0.0
      %988 = vmatprep.subr.mxu0 0.0
      %989 = vmatpush1.msra.mxu0 0.0
      %990 = vmatprep.subr.mxu0 0.0
      %991 = vmatpush1.msra.mxu0 0.0
      %992 = vmatprep.subr.mxu0 0.0
      %993 = vmatpush1.msra.mxu0 0.0
      %994 = vmatprep.subr.mxu0 0.0
      %995 = vmatpush1.msra.mxu0 0.0
      %996 = vmatprep.subr.mxu0 0.0
      %997 = vmatpush1.msra.mxu0 0.0
      %998 = vmatprep.subr.mxu0 0.0
      %999 = vmatpush1.msra.mxu0 0.0
      %1000 = vmatprep.subr.mxu0 0.0
      %1001 = vmatpush1.msra.mxu0 0.0
      %1002 = vmatprep.subr.mxu0 0.0
      %1003 = vmatpush1.msra.mxu0 0.0
      %1004 = vmatprep.subr.mxu0 0.0
      %1005 = vmatpush1.msra.mxu0 0.0
      %1006 = vmatprep.subr.mxu0 0.0
      %1007 = vmatpush1.msra.mxu0 0.0
      %1008 = vmatprep.subr.mxu0 0.0
      %1009 = vmatpush1.msra.mxu0 0.0
      %1010 = vmatprep.mubr.f32.mxu0 0.0
      %1011 = vmatmul.mubr.f32.gmra.mrb[0].mxu0 %v935
      %v1012 = vpop.f32.mrb[0].mxu0
      %v1013 = vadd.f32 %v916, %v1012
      %v1014 = vpop.f32.mrb[0].mxu0
      %v1015 = vadd.f32 %v916, %v1014
      %1016 = vmatprep.mubr.f32.mxu0 0.0
      %1017 = vmatmul.mubr.f32.gmra.mrb[0].mxu0 %v938
      %v1018 = vpop.f32.mrb[0].mxu0
      %v1019 = vadd.f32 %v921, %v1018
      %v1020 = vpop.f32.mrb[0].mxu0
      %v1021 = vadd.f32 %v921, %v1020
      %1022 = vmatprep.mubr.f32.mxu0 0.0
      %1023 = vmatmul.mubr.f32.gmra.mrb[0].mxu0 %v941
      %v1024 = vpop.f32.mrb[0].mxu0
      %v1025 = vadd.f32 %v926, %v1024
      %v1026 = vpop.f32.mrb[0].mxu0
      %v1027 = vadd.f32 %v926, %v1026
      %1028 = vmatprep.mubr.f32.mxu0 0.0
      %1029 = vmatmul.mubr.f32.gmra.mrb[0].mxu0 %v944
      %v1030 = vpop.f32.mrb[0].mxu0
      %v1031 = vadd.f32 %v931, %v1030
      %v1032 = vpop.f32.mrb[0].mxu0
      %v1033 = vadd.f32 %v931, %v1032
      %1034 = vdwg.mxu0
      %v1035 = vmax.f32 %v1013, 0.0
      %v1036 = vmax.f32 %v1015, 0.0
      %v1037 = vmax.f32 %v1019, 0.0
      %v1038 = vmax.f32 %v1021, 0.0
      %v1039 = vmax.f32 %v1025, 0.0
      %v1040 = vmax.f32 %v1027, 0.0
      %v1041 = vmax.f32 %v1031, 0.0
      %v1042 = vmax.f32 %v1033, 0.0
      %v1043 = vld [vmem:[%s6] sm:$0xff]
      %v1044 = vld [vmem:[%s6 + $0x8] sm:$0xff]
      %v1045 = vld [vmem:[%s7] sm:$0xff]
      %v1046 = vld [vmem:[%s7 + $0x8] sm:$0xff]
      %1048 = vset.pattern.permute.xlu0 0
      %1049 = vperm.xlu0 %1048, %v1045
      %v1050 = vpop.permute.xlu0 %1049
      %1053 = vset.pattern.permute.xlu0 0
      %1054 = vperm.xlu0 %1053, %v1046
      %v1055 = vpop.permute.xlu0 %1054
      %v1058 = vsel %vm933, %v1043, 0
      %v1061 = vsel %vm933, %v1044, 0
      %1063 = vmatprep.subr.mxu0 %v1036
      %1064 = vmatpush1.msra.mxu0 %v1035
      %1065 = vmatprep.subr.mxu0 %v1038
      %1066 = vmatpush1.msra.mxu0 %v1037
      %1067 = vmatprep.subr.mxu0 %v1040
      %1068 = vmatpush1.msra.mxu0 %v1039
      %1069 = vmatprep.subr.mxu0 %v1042
      %1070 = vmatpush1.msra.mxu0 %v1041
      %1071 = vmatprep.subr.mxu0 0.0
      %1072 = vmatpush1.msra.mxu0 0.0
      %1073 = vmatprep.subr.mxu0 0.0
      %1074 = vmatpush1.msra.mxu0 0.0
      %1075 = vmatprep.subr.mxu0 0.0
      %1076 = vmatpush1.msra.mxu0 0.0
      %1077 = vmatprep.subr.mxu0 0.0
      %1078 = vmatpush1.msra.mxu0 0.0
      %1079 = vmatprep.subr.mxu0 0.0
      %1080 = vmatpush1.msra.mxu0 0.0
      %1081 = vmatprep.subr.mxu0 0.0
      %1082 = vmatpush1.msra.mxu0 0.0
      %1083 = vmatprep.subr.mxu0 0.0
      %1084 = vmatpush1.msra.mxu0 0.0
      %1085 = vmatprep.subr.mxu0 0.0
      %1086 = vmatpush1.msra.mxu0 0.0
      %1087 = vmatprep.subr.mxu0 0.0
      %1088 = vmatpush1.msra.mxu0 0.0
      %1089 = vmatprep.subr.mxu0 0.0
      %1090 = vmatpush1.msra.mxu0 0.0
      %1091 = vmatprep.subr.mxu0 0.0
      %1092 = vmatpush1.msra.mxu0 0.0
      %1093 = vmatprep.subr.mxu0 0.0
      %1094 = vmatpush1.msra.mxu0 0.0
      %1095 = vmatprep.subr.mxu0 0.0
      %1096 = vmatpush1.msra.mxu0 0.0
      %1097 = vmatprep.subr.mxu0 0.0
      %1098 = vmatpush1.msra.mxu0 0.0
      %1099 = vmatprep.subr.mxu0 0.0
      %1100 = vmatpush1.msra.mxu0 0.0
      %1101 = vmatprep.subr.mxu0 0.0
      %1102 = vmatpush1.msra.mxu0 0.0
      %1103 = vmatprep.subr.mxu0 0.0
      %1104 = vmatpush1.msra.mxu0 0.0
      %1105 = vmatprep.subr.mxu0 0.0
      %1106 = vmatpush1.msra.mxu0 0.0
      %1107 = vmatprep.subr.mxu0 0.0
      %1108 = vmatpush1.msra.mxu0 0.0
      %1109 = vmatprep.subr.mxu0 0.0
      %1110 = vmatpush1.msra.mxu0 0.0
      %1111 = vmatprep.subr.mxu0 0.0
      %1112 = vmatpush1.msra.mxu0 0.0
      %1113 = vmatprep.subr.mxu0 0.0
      %1114 = vmatpush1.msra.mxu0 0.0
      %1115 = vmatprep.subr.mxu0 0.0
      %1116 = vmatpush1.msra.mxu0 0.0
      %1117 = vmatprep.subr.mxu0 0.0
      %1118 = vmatpush1.msra.mxu0 0.0
      %1119 = vmatprep.subr.mxu0 0.0
      %1120 = vmatpush1.msra.mxu0 0.0
      %1121 = vmatprep.subr.mxu0 0.0
      %1122 = vmatpush1.msra.mxu0 0.0
      %1123 = vmatprep.subr.mxu0 0.0
      %1124 = vmatpush1.msra.mxu0 0.0
      %1125 = vmatprep.subr.mxu0 0.0
      %1126 = vmatpush1.msra.mxu0 0.0
      %1127 = vmatprep.mubr.f32.mxu0 0.0
      %1128 = vmatmul.mubr.f32.gmra.mrb[0].mxu0 %v1058
      %v1129 = vpop.f32.mrb[0].mxu0
      %v1130 = vadd.f32 %v1050, %v1129
      %v1131 = vpop.f32.mrb[0].mxu0
      %v1132 = vadd.f32 %v1050, %v1131
      %1133 = vmatprep.mubr.f32.mxu0 0.0
      %1134 = vmatmul.mubr.f32.gmra.mrb[0].mxu0 %v1061
      %v1135 = vpop.f32.mrb[0].mxu0
      %v1136 = vadd.f32 %v1055, %v1135
      %v1137 = vpop.f32.mrb[0].mxu0
      %v1138 = vadd.f32 %v1055, %v1137
      %1139 = vdwg.mxu0
      %1140 = vxpose.xlu0.b32.start [1/16] %v1130, 128
      %1141 = vxpose.xlu0.b32.cont [2/16] %v1136, 128
      %1142 = vxpose.xlu0.b32.cont [3/16] 0.0, 128
      %1143 = vxpose.xlu0.b32.cont [4/16] 0.0, 128
      %1144 = vxpose.xlu0.b32.cont [5/16] 0.0, 128
      %1145 = vxpose.xlu0.b32.cont [6/16] 0.0, 128
      %1146 = vxpose.xlu0.b32.cont [7/16] 0.0, 128
      %1147 = vxpose.xlu0.b32.cont [8/16] 0.0, 128
      %1148 = vxpose.xlu0.b32.cont [9/16] 0.0, 128
      %1149 = vxpose.xlu0.b32.cont [10/16] 0.0, 128
      %1150 = vxpose.xlu0.b32.cont [11/16] 0.0, 128
      %1151 = vxpose.xlu0.b32.cont [12/16] 0.0, 128
      %1152 = vxpose.xlu0.b32.cont [13/16] 0.0, 128
      %1153 = vxpose.xlu0.b32.cont [14/16] 0.0, 128
      %1154 = vxpose.xlu0.b32.cont [15/16] 0.0, 128
      %1155 = vxpose.xlu0.b32.end [16/16] 0.0, 128
      %v1156 = vpop.trf.xlu0
      %v1157 = vpop.trf.xlu0
      %v1158 = vpop.trf.xlu0
      %v1159 = vpop.trf.xlu0
      %v1160 = vpop.trf.xlu0
      %v1161 = vpop.trf.xlu0
      %v1162 = vpop.trf.xlu0
      %v1163 = vpop.trf.xlu0
      %v1164 = vpop.trf.xlu0
      %v1165 = vpop.trf.xlu0
      %v1166 = vpop.trf.xlu0
      %v1167 = vpop.trf.xlu0
      %v1168 = vpop.trf.xlu0
      %v1169 = vpop.trf.xlu0
      %v1170 = vpop.trf.xlu0
      %v1171 = vpop.trf.xlu0
      %1172 = vxpose.xlu0.b32.start [1/16] %v1132, 128
      %1173 = vxpose.xlu0.b32.cont [2/16] %v1138, 128
      %1174 = vxpose.xlu0.b32.cont [3/16] 0.0, 128
      %1175 = vxpose.xlu0.b32.cont [4/16] 0.0, 128
      %1176 = vxpose.xlu0.b32.cont [5/16] 0.0, 128
      %1177 = vxpose.xlu0.b32.cont [6/16] 0.0, 128
      %1178 = vxpose.xlu0.b32.cont [7/16] 0.0, 128
      %1179 = vxpose.xlu0.b32.cont [8/16] 0.0, 128
      %1180 = vxpose.xlu0.b32.cont [9/16] 0.0, 128
      %1181 = vxpose.xlu0.b32.cont [10/16] 0.0, 128
      %1182 = vxpose.xlu0.b32.cont [11/16] 0.0, 128
      %1183 = vxpose.xlu0.b32.cont [12/16] 0.0, 128
      %1184 = vxpose.xlu0.b32.cont [13/16] 0.0, 128
      %1185 = vxpose.xlu0.b32.cont [14/16] 0.0, 128
      %1186 = vxpose.xlu0.b32.cont [15/16] 0.0, 128
      %1187 = vxpose.xlu0.b32.end [16/16] 0.0, 128
      %v1188 = vpop.trf.xlu0
      %v1189 = vpop.trf.xlu0
      %v1190 = vpop.trf.xlu0
      %v1191 = vpop.trf.xlu0
      %v1192 = vpop.trf.xlu0
      %v1193 = vpop.trf.xlu0
      %v1194 = vpop.trf.xlu0
      %v1195 = vpop.trf.xlu0
      %v1196 = vpop.trf.xlu0
      %v1197 = vpop.trf.xlu0
      %v1198 = vpop.trf.xlu0
      %v1199 = vpop.trf.xlu0
      %v1200 = vpop.trf.xlu0
      %v1201 = vpop.trf.xlu0
      %v1202 = vpop.trf.xlu0
      %v1203 = vpop.trf.xlu0
      %v1204 = vadd.f32 %v1156, %v639
      %v1205 = vadd.f32 %v1157, %v640
      %v1206 = vadd.f32 %v1158, %v641
      %v1207 = vadd.f32 %v1159, %v642
      %v1208 = vadd.f32 %v1160, %v643
      %v1209 = vadd.f32 %v1161, %v644
      %v1210 = vadd.f32 %v1162, %v645
      %v1211 = vadd.f32 %v1163, %v646
      %v1212 = vadd.f32 %v1164, %v647
      %v1213 = vadd.f32 %v1165, %v648
      %v1214 = vadd.f32 %v1166, %v649
      %v1215 = vadd.f32 %v1167, %v650
      %v1216 = vadd.f32 %v1168, %v651
      %v1217 = vadd.f32 %v1169, %v652
      %v1218 = vadd.f32 %v1170, %v653
      %v1219 = vadd.f32 %v1171, %v654
      %v1220 = vadd.f32 %v1188, %v655
      %v1221 = vadd.f32 %v1189, %v656
      %v1222 = vadd.f32 %v1190, %v657
      %v1223 = vadd.f32 %v1191, %v658
      %v1224 = vadd.f32 %v1192, %v659
      %v1225 = vadd.f32 %v1193, %v660
      %v1226 = vadd.f32 %v1194, %v661
      %v1227 = vadd.f32 %v1195, %v662
      %v1228 = vadd.f32 %v1196, %v663
      %v1229 = vadd.f32 %v1197, %v664
      %v1230 = vadd.f32 %v1198, %v665
      %v1231 = vadd.f32 %v1199, %v666
      %v1232 = vadd.f32 %v1200, %v667
      %v1233 = vadd.f32 %v1201, %v668
      %v1234 = vadd.f32 %v1202, %v669
      %v1235 = vadd.f32 %v1203, %v670
      %vm1236 = vcmask 130048
      %1237 = vst.msk [vmem:[%s307] sm:$0xff] %vm1236, %v1204
      %1238 = vst.msk [vmem:[%s307 + $0x8] sm:$0xff] %vm1236, %v1205
      %1239 = vst.msk [vmem:[%s307 + $0x10] sm:$0xff] %vm1236, %v1206
      %1240 = vst.msk [vmem:[%s307 + $0x18] sm:$0xff] %vm1236, %v1207
      %1241 = vst.msk [vmem:[%s307 + $0x20] sm:$0xff] %vm1236, %v1208
      %1242 = vst.msk [vmem:[%s307 + $0x28] sm:$0xff] %vm1236, %v1209
      %1243 = vst.msk [vmem:[%s307 + $0x30] sm:$0xff] %vm1236, %v1210
      %1244 = vst.msk [vmem:[%s307 + $0x38] sm:$0xff] %vm1236, %v1211
      %1245 = vst.msk [vmem:[%s307 + $0x40] sm:$0xff] %vm1236, %v1212
      %1246 = vst.msk [vmem:[%s307 + $0x48] sm:$0xff] %vm1236, %v1213
      %1247 = vst.msk [vmem:[%s307 + $0x50] sm:$0xff] %vm1236, %v1214
      %1248 = vst.msk [vmem:[%s307 + $0x58] sm:$0xff] %vm1236, %v1215
      %1249 = vst.msk [vmem:[%s307 + $0x60] sm:$0xff] %vm1236, %v1216
      %1250 = vst.msk [vmem:[%s307 + $0x68] sm:$0xff] %vm1236, %v1217
      %1251 = vst.msk [vmem:[%s307 + $0x70] sm:$0xff] %vm1236, %v1218
      %1252 = vst.msk [vmem:[%s307 + $0x78] sm:$0xff] %vm1236, %v1219
      %1253 = vst.msk [vmem:[%s307 + $0x80] sm:$0xff] %vm1236, %v1220
      %1254 = vst.msk [vmem:[%s307 + $0x88] sm:$0xff] %vm1236, %v1221
      %1255 = vst.msk [vmem:[%s307 + $0x90] sm:$0xff] %vm1236, %v1222
      %1256 = vst.msk [vmem:[%s307 + $0x98] sm:$0xff] %vm1236, %v1223
      %1257 = vst.msk [vmem:[%s307 + $0xa0] sm:$0xff] %vm1236, %v1224
      %1258 = vst.msk [vmem:[%s307 + $0xa8] sm:$0xff] %vm1236, %v1225
      %1259 = vst.msk [vmem:[%s307 + $0xb0] sm:$0xff] %vm1236, %v1226
      %1260 = vst.msk [vmem:[%s307 + $0xb8] sm:$0xff] %vm1236, %v1227
      %1261 = vst.msk [vmem:[%s307 + $0xc0] sm:$0xff] %vm1236, %v1228
      %1262 = vst.msk [vmem:[%s307 + $0xc8] sm:$0xff] %vm1236, %v1229
      %1263 = vst.msk [vmem:[%s307 + $0xd0] sm:$0xff] %vm1236, %v1230
      %1264 = vst.msk [vmem:[%s307 + $0xd8] sm:$0xff] %vm1236, %v1231
      %1265 = vst.msk [vmem:[%s307 + $0xe0] sm:$0xff] %vm1236, %v1232
      %1266 = vst.msk [vmem:[%s307 + $0xe8] sm:$0xff] %vm1236, %v1233
      %1267 = vst.msk [vmem:[%s307 + $0xf0] sm:$0xff] %vm1236, %v1234
      %1268 = vst.msk [vmem:[%s307 + $0xf8] sm:$0xff] %vm1236, %v1235
      %s1269 = smul.u32 32, %s19
      %p1270 = scmp.lt.s32.totalorder %s1269, 63
      %s1271 = scalar_select %p1270, %s1269, 63
      %s1272 = smul.addr %s1271, 8
      %s1273 = scalar_lea.vmem %s8, %s1272
      // Predicated region
      $region53: #{tpu_custom_call.1} parent=51 // pred_check
        %p1274 = pneg %p210
      $region54: #{tpu_custom_call.1} parent=51 // pred_check_branch
        %1276 = sbr.rel (%p1274) target = $region56
      $region55: #{tpu_custom_call.1} parent=51 // pred_region
        %s1277 = smul.u32 32, %s19
      $region56: #{tpu_custom_call.1} parent=51 // pred_fallthru
        _
    $region52: #{tpu_custom_call.1} parent=5 // pred_fallthru
      _
    %p1278 = scmp.le.s32.totalorder 2, %s14
    // Predicated region
    $region57: #{tpu_custom_call.1} parent=5 // pred_check
      %p1279 = pneg %p1278
    $region58: #{tpu_custom_call.1} parent=5 // pred_check_branch
      %1281 = sbr.rel (%p1279) target = $region60
    $region59: #{tpu_custom_call.1} parent=5 // pred_region
      %s1282 = ssub.s32 %s14, 2
      // Predicated region
      $region61: #{tpu_custom_call.1} parent=59 // pred_check
        %p1283 = pneg %p216
      $region62: #{tpu_custom_call.1} parent=59 // pred_check_branch
        %1285 = sbr.rel (%p1283) target = $region64
      $region63: #{tpu_custom_call.1} parent=59 // pred_region
        %s1286 = smul.u32 32, %s20
        %p1287 = scmp.lt.s32.totalorder %s1286, 63
        %s1288 = scalar_select %p1287, %s1286, 63
        %s1289 = smul.addr %s1288, 8
        %s1290 = scalar_lea.vmem %s8, %s1289
      $region64: #{tpu_custom_call.1} parent=59 // pred_fallthru
        _
    $region60: #{tpu_custom_call.1} parent=5 // pred_fallthru
      _
  $region6: #{tpu_custom_call.1} parent=0 // loop_footer
    %s18 = sadd.s32 1, %s14
  $region7: #{tpu_custom_call.1} parent=0 // loop_footer_branch
    %13 = sbr.rel target = $region3
  $region8: #{tpu_custom_call.1} parent=0 // loop_exit
    _

</llo_original>
